<compile_context>
chip_gen: v7x
topology: tpu7x:2x2x1
jax: 0.10.0
libtpu: 0.0.40
codegen_flags: <defaults>
</compile_context>

<pallas_src>
import jax
import jax.numpy as jnp
from jax.experimental import pallas as pl
from jax.experimental.pallas import tpu as pltpu

_INV_SQRT2 = 0.7071067811865476


def _mlp_kernel(x_ref, w1_ref, b1_ref, w2_ref, b2_ref, o_ref):
    # x_ref:  (1, Cin, TN)   channels on sublanes, pixels on lanes
    # w1_ref: (Cmid, Cin)
    # b1_ref: (Cmid, 1)
    # w2_ref: (Cout, Cmid)
    # b2_ref: (Cout, 1)
    # o_ref:  (1, Cout, TN)
    x = x_ref[0]                                                        # (Cin, TN), native dtype
    # First 1x1 conv: MXU matmul, f32 accumulation, no f32 up-cast of operands.
    h = jnp.dot(w1_ref[...], x, preferred_element_type=jnp.float32)    # (Cmid, TN) f32
    h = h + b1_ref[...].astype(jnp.float32)
    # Exact GELU (torch F.gelu default): 0.5*x*(1+erf(x/sqrt(2))) -- keep in f32.
    h = 0.5 * h * (1.0 + jax.lax.erf(h * _INV_SQRT2))
    # Second 1x1 conv: feed operands in the weight dtype (no-op for f32, bf16 stays bf16).
    h = h.astype(w2_ref.dtype)
    o = jnp.dot(w2_ref[...], h, preferred_element_type=jnp.float32)    # (Cout, TN) f32
    o = o + b2_ref[...].astype(jnp.float32)
    o_ref[0] = o.astype(o_ref.dtype)


def _pick_spatial_tile(hw, max_tile=2048):
    """Largest multiple of 128 that divides hw (capped at max_tile); else the full extent."""
    if hw % 128 == 0:
        tn = min(hw, max_tile)
        tn -= tn % 128
        while hw % tn:
            tn -= 128
        return tn
    # Ragged spatial extent: block == full array dim is always legal (no pad needed).
    return hw


@jax.jit
def mlp_forward(x_nchw, w1, b1, w2, b2):
    """x_nchw: (B, Cin, H, W); w1: (Cmid, Cin); b1: (Cmid,); w2: (Cout, Cmid); b2: (Cout,)."""
    B, Cin, H, W = x_nchw.shape
    Cmid = w1.shape[0]
    Cout = w2.shape[0]
    HW = H * W

    tn = _pick_spatial_tile(HW)
    grid = (B, HW // tn)

    # Free reshape: stay in NCHW, just flatten spatial dims (no HBM transpose, no pad).
    x_flat = x_nchw.reshape(B, Cin, HW)
    b1_2d = b1.reshape(Cmid, 1)
    b2_2d = b2.reshape(Cout, 1)

    n_pix = B * HW
    itemsize = x_flat.dtype.itemsize
    cost = pl.CostEstimate(
        flops=2 * n_pix * Cin * Cmid + 2 * n_pix * Cmid * Cout,
        transcendentals=n_pix * Cmid,
        bytes_accessed=(n_pix * (Cin + Cout) * itemsize
                        + (w1.size + w2.size) * w1.dtype.itemsize
                        + (b1.size + b2.size) * b1.dtype.itemsize),
    )

    out_flat = pl.pallas_call(
        _mlp_kernel,
        out_shape=jax.ShapeDtypeStruct((B, Cout, HW), x_nchw.dtype),
        grid_spec=pltpu.PrefetchScalarGridSpec(
            num_scalar_prefetch=0,
            grid=grid,
            in_specs=[
                pl.BlockSpec((1, Cin, tn), lambda b, j: (b, 0, j)),
                pl.BlockSpec((Cmid, Cin), lambda b, j: (0, 0)),
                pl.BlockSpec((Cmid, 1), lambda b, j: (0, 0)),
                pl.BlockSpec((Cout, Cmid), lambda b, j: (0, 0)),
                pl.BlockSpec((Cout, 1), lambda b, j: (0, 0)),
            ],
            out_specs=pl.BlockSpec((1, Cout, tn), lambda b, j: (b, 0, j)),
        ),
        compiler_params=pltpu.CompilerParams(
            dimension_semantics=("parallel", "parallel"),
        ),
        cost_estimate=cost,
    )(x_flat, w1, b1_2d, w2, b2_2d)

    return out_flat.reshape(B, Cout, H, W)


def _init_params(key, in_channels, mid_channels, out_channels, dtype=jnp.float32):
    """Deterministic init mimicking nn.Conv2d default (kaiming-uniform-ish bounds)."""
    k1, k2, k3, k4 = jax.random.split(key, 4)
    bound1 = 1.0 / jnp.sqrt(in_channels)
    bound2 = 1.0 / jnp.sqrt(mid_channels)
    w1 = jax.random.uniform(k1, (mid_channels, in_channels), dtype, -bound1, bound1)
    b1 = jax.random.uniform(k2, (mid_channels,), dtype, -bound1, bound1)
    w2 = jax.random.uniform(k3, (out_channels, mid_channels), dtype, -bound2, bound2)
    b2 = jax.random.uniform(k4, (out_channels,), dtype, -bound2, bound2)
    return w1, b1, w2, b2


def _reference(x_nchw, w1, b1, w2, b2):
    # Pure-JAX reference of the PyTorch forward (1x1 convs as channel matmuls).
    x = jnp.transpose(x_nchw, (0, 2, 3, 1)).astype(jnp.float32)   # NHWC
    h = jnp.einsum("bhwc,mc->bhwm", x, w1.astype(jnp.float32)) + b1.astype(jnp.float32)
    h = 0.5 * h * (1.0 + jax.lax.erf(h / jnp.sqrt(2.0)))
    o = jnp.einsum("bhwm,om->bhwo", h, w2.astype(jnp.float32)) + b2.astype(jnp.float32)
    return jnp.transpose(o, (0, 3, 1, 2)).astype(x_nchw.dtype)    # NCHW


if __name__ == "__main__":
    key = jax.random.PRNGKey(0)
    kx, kp = jax.random.split(key)

    B, Cin, H, W = 2, 4, 16, 16
    Cmid, Cout = 32, 4

    x = jax.random.normal(kx, (B, Cin, H, W), jnp.float32)
    w1, b1, w2, b2 = _init_params(kp, Cin, Cmid, Cout)

    out = mlp_forward(x, w1, b1, w2, b2)
    out = jax.block_until_ready(out)

    ref = _reference(x, w1, b1, w2, b2)
    assert out.shape == (B, Cout, H, W), out.shape
    assert jnp.allclose(out, ref, atol=1e-5, rtol=1e-5), float(jnp.max(jnp.abs(out - ref)))

    print("KERNEL_OK")
</pallas_src>

<mosaic_0001>
module attributes {stable_mosaic.version = 11 : i64} {
  func.func @_mlp_kernel(%arg0: i32, %arg1: i32, %arg2: memref<1x4x256xf32, #tpu.memory_space<vmem>>, %arg3: memref<32x4xf32, #tpu.memory_space<vmem>>, %arg4: memref<32x1xf32, #tpu.memory_space<vmem>>, %arg5: memref<4x32xf32, #tpu.memory_space<vmem>>, %arg6: memref<4x1xf32, #tpu.memory_space<vmem>>, %arg7: memref<1x4x256xf32, #tpu.memory_space<vmem>>) attributes {dimension_semantics = [#tpu.dimension_semantics<parallel>, #tpu.dimension_semantics<parallel>], iteration_bounds = array<i64: 2, 1>, scalar_prefetch = 0 : i64, scratch_operands = 0 : i64, tpu.core_type = #tpu.core_type<tc>, window_params = [{transform_indices = @transform_0, window_bounds = array<i64: 1, 4, 256>}, {pipeline_mode = #tpu.pipeline_mode<synchronous>, transform_indices = @transform_1, window_bounds = array<i64: 32, 4>}, {pipeline_mode = #tpu.pipeline_mode<synchronous>, transform_indices = @transform_2, window_bounds = array<i64: 32, 1>}, {pipeline_mode = #tpu.pipeline_mode<synchronous>, transform_indices = @transform_3, window_bounds = array<i64: 4, 32>}, {pipeline_mode = #tpu.pipeline_mode<synchronous>, transform_indices = @transform_4, window_bounds = array<i64: 4, 1>}, {transform_indices = @transform_5, window_bounds = array<i64: 1, 4, 256>}]} {
    %c0 = arith.constant 0 : index
    %c0_0 = arith.constant 0 : index
    %c0_1 = arith.constant 0 : index
    %0 = vector.load %arg2[%c0, %c0_0, %c0_1] : memref<1x4x256xf32, #tpu.memory_space<vmem>>, vector<1x4x256xf32>
    %1 = vector.shape_cast %0 : vector<1x4x256xf32> to vector<4x256xf32>
    %c0_2 = arith.constant 0 : index
    %c0_3 = arith.constant 0 : index
    %2 = vector.load %arg3[%c0_2, %c0_3] : memref<32x4xf32, #tpu.memory_space<vmem>>, vector<32x4xf32>
    %cst = arith.constant dense<0.000000e+00> : vector<32x256xf32>
    %3 = tpu.matmul %2, %1, %cst {dimension_numbers = #tpu.dot_dimension_numbers<[1], [0], [0], [1], [0, 0, 1, 1], [], []>} : vector<32x4xf32>, vector<4x256xf32>, vector<32x256xf32> -> vector<32x256xf32>
    %c0_4 = arith.constant 0 : index
    %c0_5 = arith.constant 0 : index
    %4 = vector.load %arg4[%c0_4, %c0_5] : memref<32x1xf32, #tpu.memory_space<vmem>>, vector<32x1xf32>
    %5 = vector.broadcast %4 : vector<32x1xf32> to vector<32x256xf32>
    %6 = arith.addf %3, %5 : vector<32x256xf32>
    %cst_6 = arith.constant 5.000000e-01 : f32
    %7 = vector.broadcast %cst_6 : f32 to vector<32x256xf32>
    %8 = arith.mulf %7, %6 : vector<32x256xf32>
    %cst_7 = arith.constant 0.707106769 : f32
    %9 = vector.broadcast %cst_7 : f32 to vector<32x256xf32>
    %10 = arith.mulf %6, %9 : vector<32x256xf32>
    %11 = math.erf %10 : vector<32x256xf32>
    %cst_8 = arith.constant 1.000000e+00 : f32
    %12 = vector.broadcast %cst_8 : f32 to vector<32x256xf32>
    %13 = arith.addf %12, %11 : vector<32x256xf32>
    %14 = arith.mulf %8, %13 : vector<32x256xf32>
    %c0_9 = arith.constant 0 : index
    %c0_10 = arith.constant 0 : index
    %15 = vector.load %arg5[%c0_9, %c0_10] : memref<4x32xf32, #tpu.memory_space<vmem>>, vector<4x32xf32>
    %cst_11 = arith.constant dense<0.000000e+00> : vector<4x256xf32>
    %16 = tpu.matmul %15, %14, %cst_11 {dimension_numbers = #tpu.dot_dimension_numbers<[1], [0], [0], [1], [0, 0, 1, 1], [], []>} : vector<4x32xf32>, vector<32x256xf32>, vector<4x256xf32> -> vector<4x256xf32>
    %c0_12 = arith.constant 0 : index
    %c0_13 = arith.constant 0 : index
    %17 = vector.load %arg6[%c0_12, %c0_13] : memref<4x1xf32, #tpu.memory_space<vmem>>, vector<4x1xf32>
    %18 = vector.broadcast %17 : vector<4x1xf32> to vector<4x256xf32>
    %19 = arith.addf %16, %18 : vector<4x256xf32>
    %c0_14 = arith.constant 0 : index
    %c0_15 = arith.constant 0 : index
    %c0_16 = arith.constant 0 : index
    %20 = vector.load %arg7[%c0_14, %c0_15, %c0_16] : memref<1x4x256xf32, #tpu.memory_space<vmem>>, vector<1x4x256xf32>
    %21 = vector.shape_cast %20 : vector<1x4x256xf32> to vector<4x256xf32>
    %22 = vector.shape_cast %19 : vector<4x256xf32> to vector<1x4x256xf32>
    tpu.vector_store %arg7[%c0_14, %c0_15, %c0_16], %22 {strides = array<i32>} : memref<1x4x256xf32, #tpu.memory_space<vmem>>, vector<1x4x256xf32>,
    return
  }
  func.func @transform_0(%arg0: i32, %arg1: i32) -> (i32, i32, i32) {
    %c0_i32 = arith.constant 0 : i32
    %c0_i32_0 = arith.constant 0 : i32
    return %arg0, %c0_i32, %arg1 : i32, i32, i32
  }
  func.func @transform_1(%arg0: i32, %arg1: i32) -> (i32, i32) {
    %c0_i32 = arith.constant 0 : i32
    %c0_i32_0 = arith.constant 0 : i32
    %c0_i32_1 = arith.constant 0 : i32
    return %c0_i32, %c0_i32_0 : i32, i32
  }
  func.func @transform_2(%arg0: i32, %arg1: i32) -> (i32, i32) {
    %c0_i32 = arith.constant 0 : i32
    %c0_i32_0 = arith.constant 0 : i32
    %c0_i32_1 = arith.constant 0 : i32
    return %c0_i32, %c0_i32_0 : i32, i32
  }
  func.func @transform_3(%arg0: i32, %arg1: i32) -> (i32, i32) {
    %c0_i32 = arith.constant 0 : i32
    %c0_i32_0 = arith.constant 0 : i32
    %c0_i32_1 = arith.constant 0 : i32
    return %c0_i32, %c0_i32_0 : i32, i32
  }
  func.func @transform_4(%arg0: i32, %arg1: i32) -> (i32, i32) {
    %c0_i32 = arith.constant 0 : i32
    %c0_i32_0 = arith.constant 0 : i32
    %c0_i32_1 = arith.constant 0 : i32
    return %c0_i32, %c0_i32_0 : i32, i32
  }
  func.func @transform_5(%arg0: i32, %arg1: i32) -> (i32, i32, i32) {
    %c0_i32 = arith.constant 0 : i32
    %c0_i32_0 = arith.constant 0 : i32
    return %arg0, %c0_i32, %arg1 : i32, i32, i32
  }
}

</mosaic_0001>

<llo_original>
// kernel: mlp_forward.1
$region0: #{mlp_forward.1}
  #allocation0 [shape = 'u32[]', space=smem, size = 0x4, offset = 0x4, fixed_abs, tag = 'smem constant byte address 0x4 - core index']
  #allocation1 [shape = 'u32[144,128]{1,0:T(1,128)}', space=vmem, size = 0x12000, scoped, tag = 'internal scratch']
  %s0 = inlined_call_operand.vmem [shape: f32[2,4,256], index: 0, kind: input, shape index: {}]
  %s1 = inlined_call_operand.vmem [shape: f32[32,4], index: 1, kind: input, shape index: {}]
  %s2 = inlined_call_operand.vmem [shape: f32[32,1], index: 2, kind: input, shape index: {}]
  %s3 = inlined_call_operand.vmem [shape: f32[4,32], index: 3, kind: input, shape index: {}]
  %s4 = inlined_call_operand.vmem [shape: f32[4,1], index: 4, kind: input, shape index: {}]
  %s5 = inlined_call_operand.vmem [shape: f32[2,4,256], index: 5, kind: output, shape index: {}]
  %s6 = sld [smem:[#allocation0]]
  $region53: #{mlp_forward.1} parent=0
    _
  %s8 = ssub.s32 1, %s6
  %s9 = scalar_select 0, %s8, %s6
  loop: start=0, step=1, limit=4
  $region2: #{mlp_forward.1} parent=0 // loop_pre_header
    _
  $region3: #{mlp_forward.1} parent=0 // loop_header
    %s11 = sphi 0, %s15
    %p12 = scmp.ge.s32.totalorder %s11, 4
    %s18 = sphi 0, %s30
    %s19 = sphi 0, %s26
    %s20 = sphi 0, %s18
    %s21 = sphi 0, %s19
    %s22 = sphi 0, %s20
    %s23 = sphi 0, %s21
    %s35 = sphi 0, %s37
    %s38 = sphi 0, %s35
    %s39 = sphi 0, %s38
    %s55 = sphi 0, %s39
    %s59 = sphi 0, %s59
    %s61 = sphi 0, %s59
    %s62 = sphi 0, %s61
    %s76 = sphi 0, %s62
    %s80 = sphi 0, %s80
    %s82 = sphi 0, %s80
    %s83 = sphi 0, %s82
    %s97 = sphi 0, %s83
    %s101 = sphi 0, %s101
    %s103 = sphi 0, %s101
    %s104 = sphi 0, %s103
    %s118 = sphi 0, %s104
    %s122 = sphi 0, %s122
    %s124 = sphi 0, %s122
    %s125 = sphi 0, %s124
    %s139 = sphi 0, %s125
    %s147 = sphi 0, %s149
    %s150 = sphi 0, %s147
    %s151 = sphi 0, %s150
    %s167 = sphi 0, %s151
  $region4: #{mlp_forward.1} parent=0 // loop_header_branch
    %14 = sbr.rel (%p12) target = $region8
  $region5: #{mlp_forward.1} parent=0 // loop_body
    %s16 = ssub.s32 %s11, 1
    %s17 = ssub.s32 %s11, 2
    %s24 = sadd.s32 1, %s19
    %p25 = scmp.ge.s32.totalorder %s24, 1
    %s26 = scalar_select %p25, 0, %s24
    %s27 = sadd.s32 1, %s18
    %s28 = scalar_select %p25, %s27, %s18
    %p29 = scmp.ge.s32.totalorder %s28, 2
    %s30 = scalar_select %p29, 0, %s28
    %s31 = ssub.s32 %s18, %s30
    %s32 = ssub.s32 %s19, %s26
    %s33 = sor.u32 %s31, %s32
    %p34 = scmp.eq.s32.totalorder %s33, 0
    %s36 = sadd.s32 %s35, 1
    %s37 = scalar_select %p34, %s35, %s36
    %p40 = pneg %p34
    %p41 = scmp.eq.s32.totalorder %s11, 1
    %p42 = por %p40, %p41
    %p43 = scmp.ne.s32.totalorder %s35, %s38
    %p44 = scmp.eq.s32.totalorder %s11, 0
    %p45 = por %p43, %p44
    %p46 = scmp.ne.s32.totalorder %s35, %s38
    %p47 = scmp.eq.s32.totalorder %s16, 1
    %p48 = por %p46, %p47
    %p49 = scmp.ne.s32.totalorder %s38, %s39
    %p50 = scmp.eq.s32.totalorder %s16, 0
    %p51 = por %p49, %p50
    %p52 = scmp.ne.s32.totalorder %s38, %s39
    %p53 = scmp.eq.s32.totalorder %s17, 1
    %p54 = por %p52, %p53
    %p56 = scmp.ne.s32.totalorder %s39, %s55
    %p57 = scmp.eq.s32.totalorder %s17, 0
    %p58 = por %p56, %p57
    %s60 = sadd.s32 %s59, 1
    %p63 = scmp.eq.s32.totalorder %s11, 1
    %p64 = scmp.ne.s32.totalorder %s59, %s61
    %p65 = scmp.eq.s32.totalorder %s11, 0
    %p66 = por %p64, %p65
    %p67 = scmp.ne.s32.totalorder %s59, %s61
    %p68 = scmp.eq.s32.totalorder %s16, 1
    %p69 = por %p67, %p68
    %p70 = scmp.ne.s32.totalorder %s61, %s62
    %p71 = scmp.eq.s32.totalorder %s16, 0
    %p72 = por %p70, %p71
    %p73 = scmp.ne.s32.totalorder %s61, %s62
    %p74 = scmp.eq.s32.totalorder %s17, 1
    %p75 = por %p73, %p74
    %p77 = scmp.ne.s32.totalorder %s62, %s76
    %p78 = scmp.eq.s32.totalorder %s17, 0
    %p79 = por %p77, %p78
    %s81 = sadd.s32 %s80, 1
    %p84 = scmp.eq.s32.totalorder %s11, 1
    %p85 = scmp.ne.s32.totalorder %s80, %s82
    %p86 = scmp.eq.s32.totalorder %s11, 0
    %p87 = por %p85, %p86
    %p88 = scmp.ne.s32.totalorder %s80, %s82
    %p89 = scmp.eq.s32.totalorder %s16, 1
    %p90 = por %p88, %p89
    %p91 = scmp.ne.s32.totalorder %s82, %s83
    %p92 = scmp.eq.s32.totalorder %s16, 0
    %p93 = por %p91, %p92
    %p94 = scmp.ne.s32.totalorder %s82, %s83
    %p95 = scmp.eq.s32.totalorder %s17, 1
    %p96 = por %p94, %p95
    %p98 = scmp.ne.s32.totalorder %s83, %s97
    %p99 = scmp.eq.s32.totalorder %s17, 0
    %p100 = por %p98, %p99
    %s102 = sadd.s32 %s101, 1
    %p105 = scmp.eq.s32.totalorder %s11, 1
    %p106 = scmp.ne.s32.totalorder %s101, %s103
    %p107 = scmp.eq.s32.totalorder %s11, 0
    %p108 = por %p106, %p107
    %p109 = scmp.ne.s32.totalorder %s101, %s103
    %p110 = scmp.eq.s32.totalorder %s16, 1
    %p111 = por %p109, %p110
    %p112 = scmp.ne.s32.totalorder %s103, %s104
    %p113 = scmp.eq.s32.totalorder %s16, 0
    %p114 = por %p112, %p113
    %p115 = scmp.ne.s32.totalorder %s103, %s104
    %p116 = scmp.eq.s32.totalorder %s17, 1
    %p117 = por %p115, %p116
    %p119 = scmp.ne.s32.totalorder %s104, %s118
    %p120 = scmp.eq.s32.totalorder %s17, 0
    %p121 = por %p119, %p120
    %s123 = sadd.s32 %s122, 1
    %p126 = scmp.eq.s32.totalorder %s11, 1
    %p127 = scmp.ne.s32.totalorder %s122, %s124
    %p128 = scmp.eq.s32.totalorder %s11, 0
    %p129 = por %p127, %p128
    %p130 = scmp.ne.s32.totalorder %s122, %s124
    %p131 = scmp.eq.s32.totalorder %s16, 1
    %p132 = por %p130, %p131
    %p133 = scmp.ne.s32.totalorder %s124, %s125
    %p134 = scmp.eq.s32.totalorder %s16, 0
    %p135 = por %p133, %p134
    %p136 = scmp.ne.s32.totalorder %s124, %s125
    %p137 = scmp.eq.s32.totalorder %s17, 1
    %p138 = por %p136, %p137
    %p140 = scmp.ne.s32.totalorder %s125, %s139
    %p141 = scmp.eq.s32.totalorder %s17, 0
    %p142 = por %p140, %p141
    %s143 = ssub.s32 %s18, %s30
    %s144 = ssub.s32 %s19, %s26
    %s145 = sor.u32 %s143, %s144
    %p146 = scmp.eq.s32.totalorder %s145, 0
    %s148 = sadd.s32 %s147, 1
    %s149 = scalar_select %p146, %s147, %s148
    %p152 = pneg %p146
    %p153 = scmp.eq.s32.totalorder %s11, 1
    %p154 = por %p152, %p153
    %p155 = scmp.ne.s32.totalorder %s147, %s150
    %p156 = scmp.eq.s32.totalorder %s11, 0
    %p157 = por %p155, %p156
    %p158 = scmp.ne.s32.totalorder %s147, %s150
    %p159 = scmp.eq.s32.totalorder %s16, 1
    %p160 = por %p158, %p159
    %p161 = scmp.ne.s32.totalorder %s150, %s151
    %p162 = scmp.eq.s32.totalorder %s16, 0
    %p163 = por %p161, %p162
    %p164 = scmp.ne.s32.totalorder %s150, %s151
    %p165 = scmp.eq.s32.totalorder %s17, 1
    %p166 = por %p164, %p165
    %p168 = scmp.ne.s32.totalorder %s151, %s167
    %p169 = scmp.eq.s32.totalorder %s17, 0
    %p170 = por %p168, %p169
    %p171 = scmp.le.s32.totalorder 1, %s11
    %p172 = scmp.lt.s32.totalorder %s11, 3
    %p173 = pnand %p171, %p172
    %p174 = pneg %p173
    // Predicated region
    $region9: #{mlp_forward.1} parent=5 // pred_check
      _
    $region10: #{mlp_forward.1} parent=5 // pred_check_branch
      %176 = sbr.rel (%p173) target = $region12
    $region11: #{mlp_forward.1} parent=5 // pred_region
      %s177 = ssub.s32 %s11, 1
      // Predicated region
      $region13: #{mlp_forward.1} parent=11 // pred_check
        %p178 = pneg %p72
      $region14: #{mlp_forward.1} parent=11 // pred_check_branch
        %180 = sbr.rel (%p178) target = $region16
      $region15: #{mlp_forward.1} parent=11 // pred_region
        _
      $region16: #{mlp_forward.1} parent=11 // pred_fallthru
        _
      // Predicated region
      $region17: #{mlp_forward.1} parent=11 // pred_check
        %p181 = pneg %p93
      $region18: #{mlp_forward.1} parent=11 // pred_check_branch
        %183 = sbr.rel (%p181) target = $region20
      $region19: #{mlp_forward.1} parent=11 // pred_region
        _
      $region20: #{mlp_forward.1} parent=11 // pred_fallthru
        _
      // Predicated region
      $region21: #{mlp_forward.1} parent=11 // pred_check
        %p184 = pneg %p114
      $region22: #{mlp_forward.1} parent=11 // pred_check_branch
        %186 = sbr.rel (%p184) target = $region24
      $region23: #{mlp_forward.1} parent=11 // pred_region
        _
      $region24: #{mlp_forward.1} parent=11 // pred_fallthru
        _
      // Predicated region
      $region25: #{mlp_forward.1} parent=11 // pred_check
        %p187 = pneg %p135
      $region26: #{mlp_forward.1} parent=11 // pred_check_branch
        %189 = sbr.rel (%p187) target = $region28
      $region27: #{mlp_forward.1} parent=11 // pred_region
        _
      $region28: #{mlp_forward.1} parent=11 // pred_fallthru
        _
    $region12: #{mlp_forward.1} parent=5 // pred_fallthru
      _
    %p190 = scmp.lt.s32.totalorder %s11, 2
    // Predicated region
    $region29: #{mlp_forward.1} parent=5 // pred_check
      %p191 = pneg %p190
    $region30: #{mlp_forward.1} parent=5 // pred_check_branch
      %193 = sbr.rel (%p191) target = $region32
    $region31: #{mlp_forward.1} parent=5 // pred_region
      // Predicated region
      $region33: #{mlp_forward.1} parent=31 // pred_check
        %p194 = pneg %p45
      $region34: #{mlp_forward.1} parent=31 // pred_check_branch
        %196 = sbr.rel (%p194) target = $region36
      $region35: #{mlp_forward.1} parent=31 // pred_region
        %s197 = smul.u32 2, %s19
        %p198 = scmp.lt.s32.totalorder %s18, 1
        %s199 = scalar_select %p198, %s18, 1
        %p200 = scmp.lt.s32.totalorder %s197, 1
        %s201 = scalar_select %p200, %s197, 1
        %s202 = smul.addr %s199, 2
        %s203 = sadd.s32 %s201, %s202
        %s204 = smul.addr %s203, 4
        %s205 = scalar_lea.vmem %s0, %s204
        %s206 = smul.u32 2, %s19
      $region36: #{mlp_forward.1} parent=31 // pred_fallthru
        _
    $region32: #{mlp_forward.1} parent=5 // pred_fallthru
      _
    %p207 = scmp.le.s32.totalorder 1, %s11
    %p208 = scmp.lt.s32.totalorder %s11, 3
    %p209 = pnand %p207, %p208
    %p210 = pneg %p209
    // Predicated region
    $region37: #{mlp_forward.1} parent=5 // pred_check
      _
    $region38: #{mlp_forward.1} parent=5 // pred_check_branch
      %212 = sbr.rel (%p209) target = $region40
    $region39: #{mlp_forward.1} parent=5 // pred_region
      %s213 = ssub.s32 %s11, 1
      %s214 = smul.u32 2, %s21
      %p215 = scmp.lt.s32.totalorder %s20, 1
      %s216 = scalar_select %p215, %s20, 1
      %p217 = scmp.lt.s32.totalorder %s214, 1
      %s218 = scalar_select %p217, %s214, 1
      %s219 = smul.addr %s216, 2
      %s220 = sadd.s32 %s218, %s219
      %s221 = smul.addr %s220, 4
      %s222 = scalar_lea.vmem %s0, %s221
      %p223 = pneg %p51
      %p224 = pneg %p48
      %p225 = pneg %p72
      %p226 = pneg %p69
      %p227 = pneg %p93
      %p228 = pneg %p90
      %p229 = pneg %p114
      %p230 = pneg %p111
      %p231 = pneg %p135
      %p232 = pneg %p132
      %p233 = pneg %p163
      %p234 = pneg %p160
      %s235 = smul.u32 2, %s21
      %p236 = scmp.lt.s32.totalorder %s20, 1
      %s237 = scalar_select %p236, %s20, 1
      %p238 = scmp.lt.s32.totalorder %s235, 1
      %s239 = scalar_select %p238, %s235, 1
      %s240 = smul.addr %s237, 2
      %s241 = sadd.s32 %s239, %s240
      %s242 = smul.addr %s241, 4
      %s243 = scalar_lea.vmem %s5, %s242
      %s244 = smul.u32 2, %s21
      %p245 = scmp.lt.s32.totalorder %s20, 1
      %s246 = scalar_select %p245, %s20, 1
      %p247 = scmp.lt.s32.totalorder %s244, 1
      %s248 = scalar_select %p247, %s244, 1
      %s249 = smul.addr %s246, 2
      %s250 = sadd.s32 %s248, %s249
      %s251 = smul.addr %s250, 4
      %s252 = scalar_lea.vmem %s0, %s251
      %s253 = smul.u32 2, %s21
      %s254 = smul.u32 2, %s21
      %p255 = scmp.lt.s32.totalorder %s20, 1
      %s256 = scalar_select %p255, %s20, 1
      %p257 = scmp.lt.s32.totalorder %s254, 1
      %s258 = scalar_select %p257, %s254, 1
      %s259 = smul.addr %s256, 2
      %s260 = sadd.s32 %s258, %s259
      %s261 = smul.addr %s260, 4
      %s262 = scalar_lea.vmem %s5, %s261
      %s263 = smul.u32 2, %s21
      %v264 = vld [vmem:[%s252] sm:$0xff]
      %v265 = vld [vmem:[%s1] sm:$0xff]
      %v266 = vld [vmem:[%s1 + $0x8] sm:$0xff]
      %v267 = vld [vmem:[%s1 + $0x10] sm:$0xff]
      %v268 = vld [vmem:[%s1 + $0x18] sm:$0xff]
      %v269 = vld [vmem:[%s2] sm:$0xff]
      %v270 = vld [vmem:[%s2 + $0x8] sm:$0xff]
      %v271 = vld [vmem:[%s2 + $0x10] sm:$0xff]
      %v272 = vld [vmem:[%s2 + $0x18] sm:$0xff]
      %274 = vset.pattern.permute.xlu0 0
      %275 = vperm.xlu0 %274, %v269
      %v276 = vpop.permute.xlu0 %275
      %279 = vset.pattern.permute.xlu0 0
      %280 = vperm.xlu0 %279, %v270
      %v281 = vpop.permute.xlu0 %280
      %284 = vset.pattern.permute.xlu0 0
      %285 = vperm.xlu0 %284, %v271
      %v286 = vpop.permute.xlu0 %285
      %289 = vset.pattern.permute.xlu0 0
      %290 = vperm.xlu0 %289, %v272
      %v291 = vpop.permute.xlu0 %290
      %v294 = vcombine.high %v264, %v264
      %vm295 = vcmask 31744
      %v297 = vsel %vm295, %v265, 0
      %v300 = vsel %vm295, %v266, 0
      %v303 = vsel %vm295, %v267, 0
      %v306 = vsel %vm295, %v268, 0
      %vm308 = vcmask 1043456
      %v309 = vsel %vm308, %v264, 0
      %v311 = vsel %vm308, %v294, 0
      %313 = vmatprep.subr.mxu0 %v311
      %314 = vmatpush1.msra.mxu0 %v309
      %315 = vmatprep.subr.mxu0 0.0
      %316 = vmatpush1.msra.mxu0 0.0
      %317 = vmatprep.subr.mxu0 0.0
      %318 = vmatpush1.msra.mxu0 0.0
      %319 = vmatprep.subr.mxu0 0.0
      %320 = vmatpush1.msra.mxu0 0.0
      %321 = vmatprep.subr.mxu0 0.0
      %322 = vmatpush1.msra.mxu0 0.0
      %323 = vmatprep.subr.mxu0 0.0
      %324 = vmatpush1.msra.mxu0 0.0
      %325 = vmatprep.subr.mxu0 0.0
      %326 = vmatpush1.msra.mxu0 0.0
      %327 = vmatprep.subr.mxu0 0.0
      %328 = vmatpush1.msra.mxu0 0.0
      %329 = vmatprep.subr.mxu0 0.0
      %330 = vmatpush1.msra.mxu0 0.0
      %331 = vmatprep.subr.mxu0 0.0
      %332 = vmatpush1.msra.mxu0 0.0
      %333 = vmatprep.subr.mxu0 0.0
      %334 = vmatpush1.msra.mxu0 0.0
      %335 = vmatprep.subr.mxu0 0.0
      %336 = vmatpush1.msra.mxu0 0.0
      %337 = vmatprep.subr.mxu0 0.0
      %338 = vmatpush1.msra.mxu0 0.0
      %339 = vmatprep.subr.mxu0 0.0
      %340 = vmatpush1.msra.mxu0 0.0
      %341 = vmatprep.subr.mxu0 0.0
      %342 = vmatpush1.msra.mxu0 0.0
      %343 = vmatprep.subr.mxu0 0.0
      %344 = vmatpush1.msra.mxu0 0.0
      %345 = vmatprep.subr.mxu0 0.0
      %346 = vmatpush1.msra.mxu0 0.0
      %347 = vmatprep.subr.mxu0 0.0
      %348 = vmatpush1.msra.mxu0 0.0
      %349 = vmatprep.subr.mxu0 0.0
      %350 = vmatpush1.msra.mxu0 0.0
      %351 = vmatprep.subr.mxu0 0.0
      %352 = vmatpush1.msra.mxu0 0.0
      %353 = vmatprep.subr.mxu0 0.0
      %354 = vmatpush1.msra.mxu0 0.0
      %355 = vmatprep.subr.mxu0 0.0
      %356 = vmatpush1.msra.mxu0 0.0
      %357 = vmatprep.subr.mxu0 0.0
      %358 = vmatpush1.msra.mxu0 0.0
      %359 = vmatprep.subr.mxu0 0.0
      %360 = vmatpush1.msra.mxu0 0.0
      %361 = vmatprep.subr.mxu0 0.0
      %362 = vmatpush1.msra.mxu0 0.0
      %363 = vmatprep.subr.mxu0 0.0
      %364 = vmatpush1.msra.mxu0 0.0
      %365 = vmatprep.subr.mxu0 0.0
      %366 = vmatpush1.msra.mxu0 0.0
      %367 = vmatprep.subr.mxu0 0.0
      %368 = vmatpush1.msra.mxu0 0.0
      %369 = vmatprep.subr.mxu0 0.0
      %370 = vmatpush1.msra.mxu0 0.0
      %371 = vmatprep.subr.mxu0 0.0
      %372 = vmatpush1.msra.mxu0 0.0
      %373 = vmatprep.subr.mxu0 0.0
      %374 = vmatpush1.msra.mxu0 0.0
      %375 = vmatprep.subr.mxu0 0.0
      %376 = vmatpush1.msra.mxu0 0.0
      %377 = vmatprep.mubr.f32.mxu0 0.0
      %378 = vmatmul.mubr.f32.gmra.mrb[0].mxu0 %v297
      %v379 = vpop.f32.mrb[0].mxu0
      %v380 = vadd.f32 %v276, %v379
      %v381 = vpop.f32.mrb[0].mxu0
      %v382 = vadd.f32 %v276, %v381
      %383 = vmatprep.mubr.f32.mxu0 0.0
      %384 = vmatmul.mubr.f32.gmra.mrb[0].mxu0 %v300
      %v385 = vpop.f32.mrb[0].mxu0
      %v386 = vadd.f32 %v281, %v385
      %v387 = vpop.f32.mrb[0].mxu0
      %v388 = vadd.f32 %v281, %v387
      %389 = vmatprep.mubr.f32.mxu0 0.0
      %390 = vmatmul.mubr.f32.gmra.mrb[0].mxu0 %v303
      %v391 = vpop.f32.mrb[0].mxu0
      %v392 = vadd.f32 %v286, %v391
      %v393 = vpop.f32.mrb[0].mxu0
      %v394 = vadd.f32 %v286, %v393
      %395 = vmatprep.mubr.f32.mxu0 0.0
      %396 = vmatmul.mubr.f32.gmra.mrb[0].mxu0 %v306
      %v397 = vpop.f32.mrb[0].mxu0
      %v398 = vadd.f32 %v291, %v397
      %v399 = vpop.f32.mrb[0].mxu0
      %v400 = vadd.f32 %v291, %v399
      %401 = vdwg.mxu0
      %v402 = vmul.f32 %v380, 0.5
      %v403 = vmul.f32 %v382, 0.5
      %v404 = vmul.f32 %v386, 0.5
      %v405 = vmul.f32 %v388, 0.5
      %v406 = vmul.f32 %v392, 0.5
      %v407 = vmul.f32 %v394, 0.5
      %v408 = vmul.f32 %v398, 0.5
      %v409 = vmul.f32 %v400, 0.5
      %v410 = vmul.f32 %v380, 0.70710677
      %v411 = vmul.f32 %v382, 0.70710677
      %v412 = vmul.f32 %v386, 0.70710677
      %v413 = vmul.f32 %v388, 0.70710677
      %v414 = vmul.f32 %v392, 0.70710677
      %v415 = vmul.f32 %v394, 0.70710677
      %v416 = vmul.f32 %v398, 0.70710677
      %v417 = vmul.f32 %v400, 0.70710677
      %v418 = verf.f32.pop %v410
      %v419 = verf.f32.pop %v411
      %v420 = verf.f32.pop %v412
      %v421 = verf.f32.pop %v413
      %v422 = verf.f32.pop %v414
      %v423 = verf.f32.pop %v415
      %v424 = verf.f32.pop %v416
      %v425 = verf.f32.pop %v417
      %v426 = vadd.f32 %v418, 1.0
      %v427 = vadd.f32 %v419, 1.0
      %v428 = vadd.f32 %v420, 1.0
      %v429 = vadd.f32 %v421, 1.0
      %v430 = vadd.f32 %v422, 1.0
      %v431 = vadd.f32 %v423, 1.0
      %v432 = vadd.f32 %v424, 1.0
      %v433 = vadd.f32 %v425, 1.0
      %v434 = vmul.f32 %v402, %v426
      %v435 = vmul.f32 %v403, %v427
      %v436 = vmul.f32 %v404, %v428
      %v437 = vmul.f32 %v405, %v429
      %v438 = vmul.f32 %v406, %v430
      %v439 = vmul.f32 %v407, %v431
      %v440 = vmul.f32 %v408, %v432
      %v441 = vmul.f32 %v409, %v433
      %v442 = vld [vmem:[%s3] sm:$0xf]
      %v443 = vld [vmem:[%s4] sm:$0xf]
      %445 = vset.pattern.permute.xlu0 0
      %446 = vperm.xlu0 %445, %v443
      %v447 = vpop.permute.xlu0 %446
      %vm449 = vcmask 261120
      %v451 = vsel %vm449, %v442, 0
      %453 = vmatprep.subr.mxu0 %v435
      %454 = vmatpush1.msra.mxu0 %v434
      %455 = vmatprep.subr.mxu0 %v437
      %456 = vmatpush1.msra.mxu0 %v436
      %457 = vmatprep.subr.mxu0 %v439
      %458 = vmatpush1.msra.mxu0 %v438
      %459 = vmatprep.subr.mxu0 %v441
      %460 = vmatpush1.msra.mxu0 %v440
      %461 = vmatprep.subr.mxu0 0.0
      %462 = vmatpush1.msra.mxu0 0.0
      %463 = vmatprep.subr.mxu0 0.0
      %464 = vmatpush1.msra.mxu0 0.0
      %465 = vmatprep.subr.mxu0 0.0
      %466 = vmatpush1.msra.mxu0 0.0
      %467 = vmatprep.subr.mxu0 0.0
      %468 = vmatpush1.msra.mxu0 0.0
      %469 = vmatprep.subr.mxu0 0.0
      %470 = vmatpush1.msra.mxu0 0.0
      %471 = vmatprep.subr.mxu0 0.0
      %472 = vmatpush1.msra.mxu0 0.0
      %473 = vmatprep.subr.mxu0 0.0
      %474 = vmatpush1.msra.mxu0 0.0
      %475 = vmatprep.subr.mxu0 0.0
      %476 = vmatpush1.msra.mxu0 0.0
      %477 = vmatprep.subr.mxu0 0.0
      %478 = vmatpush1.msra.mxu0 0.0
      %479 = vmatprep.subr.mxu0 0.0
      %480 = vmatpush1.msra.mxu0 0.0
      %481 = vmatprep.subr.mxu0 0.0
      %482 = vmatpush1.msra.mxu0 0.0
      %483 = vmatprep.subr.mxu0 0.0
      %484 = vmatpush1.msra.mxu0 0.0
      %485 = vmatprep.subr.mxu0 0.0
      %486 = vmatpush1.msra.mxu0 0.0
      %487 = vmatprep.subr.mxu0 0.0
      %488 = vmatpush1.msra.mxu0 0.0
      %489 = vmatprep.subr.mxu0 0.0
      %490 = vmatpush1.msra.mxu0 0.0
      %491 = vmatprep.subr.mxu0 0.0
      %492 = vmatpush1.msra.mxu0 0.0
      %493 = vmatprep.subr.mxu0 0.0
      %494 = vmatpush1.msra.mxu0 0.0
      %495 = vmatprep.subr.mxu0 0.0
      %496 = vmatpush1.msra.mxu0 0.0
      %497 = vmatprep.subr.mxu0 0.0
      %498 = vmatpush1.msra.mxu0 0.0
      %499 = vmatprep.subr.mxu0 0.0
      %500 = vmatpush1.msra.mxu0 0.0
      %501 = vmatprep.subr.mxu0 0.0
      %502 = vmatpush1.msra.mxu0 0.0
      %503 = vmatprep.subr.mxu0 0.0
      %504 = vmatpush1.msra.mxu0 0.0
      %505 = vmatprep.subr.mxu0 0.0
      %506 = vmatpush1.msra.mxu0 0.0
      %507 = vmatprep.subr.mxu0 0.0
      %508 = vmatpush1.msra.mxu0 0.0
      %509 = vmatprep.subr.mxu0 0.0
      %510 = vmatpush1.msra.mxu0 0.0
      %511 = vmatprep.subr.mxu0 0.0
      %512 = vmatpush1.msra.mxu0 0.0
      %513 = vmatprep.subr.mxu0 0.0
      %514 = vmatpush1.msra.mxu0 0.0
      %515 = vmatprep.subr.mxu0 0.0
      %516 = vmatpush1.msra.mxu0 0.0
      %517 = vmatprep.mubr.f32.mxu0 0.0
      %518 = vmatmul.mubr.f32.gmra.mrb[0].mxu0 %v451
      %v519 = vpop.f32.mrb[0].mxu0
      %v520 = vadd.f32 %v447, %v519
      %v521 = vpop.f32.mrb[0].mxu0
      %v522 = vadd.f32 %v447, %v521
      %523 = vdwg.mxu0
      %v526 = vcombine.low %v520, %v522
      %528 = vst [vmem:[%s262] sm:$0xff] %v526
      %s529 = smul.u32 2, %s21
      %p530 = scmp.lt.s32.totalorder %s20, 1
      %s531 = scalar_select %p530, %s20, 1
      %p532 = scmp.lt.s32.totalorder %s529, 1
      %s533 = scalar_select %p532, %s529, 1
      %s534 = smul.addr %s531, 2
      %s535 = sadd.s32 %s533, %s534
      %s536 = smul.addr %s535, 4
      %s537 = scalar_lea.vmem %s5, %s536
      // Predicated region
      $region41: #{mlp_forward.1} parent=39 // pred_check
        %p538 = pneg %p160
      $region42: #{mlp_forward.1} parent=39 // pred_check_branch
        %540 = sbr.rel (%p538) target = $region44
      $region43: #{mlp_forward.1} parent=39 // pred_region
        %s541 = smul.u32 2, %s21
      $region44: #{mlp_forward.1} parent=39 // pred_fallthru
        _
    $region40: #{mlp_forward.1} parent=5 // pred_fallthru
      _
    %p542 = scmp.le.s32.totalorder 2, %s11
    // Predicated region
    $region45: #{mlp_forward.1} parent=5 // pred_check
      %p543 = pneg %p542
    $region46: #{mlp_forward.1} parent=5 // pred_check_branch
      %545 = sbr.rel (%p543) target = $region48
    $region47: #{mlp_forward.1} parent=5 // pred_region
      %s546 = ssub.s32 %s11, 2
      // Predicated region
      $region49: #{mlp_forward.1} parent=47 // pred_check
        %p547 = pneg %p166
      $region50: #{mlp_forward.1} parent=47 // pred_check_branch
        %549 = sbr.rel (%p547) target = $region52
      $region51: #{mlp_forward.1} parent=47 // pred_region
        %s550 = smul.u32 2, %s23
        %p551 = scmp.lt.s32.totalorder %s22, 1
        %s552 = scalar_select %p551, %s22, 1
        %p553 = scmp.lt.s32.totalorder %s550, 1
        %s554 = scalar_select %p553, %s550, 1
        %s555 = smul.addr %s552, 2
        %s556 = sadd.s32 %s554, %s555
        %s557 = smul.addr %s556, 4
        %s558 = scalar_lea.vmem %s5, %s557
      $region52: #{mlp_forward.1} parent=47 // pred_fallthru
        _
    $region48: #{mlp_forward.1} parent=5 // pred_fallthru
      _
  $region6: #{mlp_forward.1} parent=0 // loop_footer
    %s15 = sadd.s32 1, %s11
  $region7: #{mlp_forward.1} parent=0 // loop_footer_branch
    %10 = sbr.rel target = $region3
  $region8: #{mlp_forward.1} parent=0 // loop_exit
    _

</llo_original>
